<compile_context>
chip_gen: v7x
topology: tpu7x:2x2x1
jax: 0.10.0
libtpu: 0.0.40
codegen_flags: <defaults>
</compile_context>

<pallas_src>
import jax
import jax.numpy as jnp
from jax.experimental import pallas as pl
from jax.experimental.pallas import tpu as pltpu


# ----------------------------------------------------------------------------
# small helpers
# ----------------------------------------------------------------------------
def _round_up(x, m):
    return ((x + m - 1) // m) * m


def _pick_tile(total, max_tile, quantum):
    """Largest divisor of `total` that is a multiple of `quantum` and <= max_tile."""
    best = quantum
    t = quantum
    limit = min(total, max_tile)
    while t <= limit:
        if total % t == 0:
            best = t
        t += quantum
    return best


def _pad2(x, rows, cols):
    r, c = x.shape
    if r == rows and c == cols:
        return x
    return jnp.pad(x, ((0, rows - r), (0, cols - c)))


def _bn_fold(gamma, beta, mean, var, eps=1e-5):
    scale = gamma / jnp.sqrt(var + eps)
    shift = beta - mean * scale
    return scale, shift


def _im2col_3x3(x_nhwc, stride):
    N, H, W, C = x_nhwc.shape
    Ho = (H + 2 - 3) // stride + 1
    Wo = (W + 2 - 3) // stride + 1
    xp = jnp.pad(x_nhwc, ((0, 0), (1, 1), (1, 1), (0, 0)))
    cols = []
    for kh in range(3):
        for kw in range(3):
            sl = xp[:, kh: kh + (Ho - 1) * stride + 1: stride,
                       kw: kw + (Wo - 1) * stride + 1: stride, :]
            cols.append(sl)
    patches = jnp.concatenate(cols, axis=-1)           # (N, Ho, Wo, 9*C)
    return patches.reshape(N * Ho * Wo, 9 * C), (N, Ho, Wo)


# ----------------------------------------------------------------------------
# Pallas kernel: tiled (TM,TK)x(TK,CP) matmul with f32 accumulator and a fused
# shift (+ identity residual add | + 1x1-shortcut dot) (+ ReLU) epilogue.
# res_mode: 0 = no residual, 1 = direct add, 2 = residual @ res_w (1x1 conv).
# ----------------------------------------------------------------------------
def _make_kernel(apply_relu, res_mode):
    def kernel(*refs):
        p_ref, w_ref, shift_ref = refs[0], refs[1], refs[2]
        res_ref = refs[3] if res_mode >= 1 else None
        rw_ref = refs[4] if res_mode == 2 else None
        o_ref, acc_ref = refs[-2], refs[-1]

        k = pl.program_id(1)

        @pl.when(k == 0)
        def _():
            acc_ref[...] = jnp.zeros_like(acc_ref)

        acc_ref[...] += jnp.dot(p_ref[...], w_ref[...],
                                preferred_element_type=jnp.float32)

        @pl.when(k == pl.num_programs(1) - 1)
        def _():
            y = acc_ref[...] + shift_ref[...]
            if res_mode == 1:            # identity residual
                y = y + res_ref[...].astype(jnp.float32)
            elif res_mode == 2:          # fused 1x1 shortcut conv
                y = y + jnp.dot(res_ref[...], rw_ref[...],
                                preferred_element_type=jnp.float32)
            if apply_relu:
                y = jnp.maximum(y, 0.0)
            o_ref[...] = y.astype(o_ref.dtype)

    return kernel


def _fused_conv_matmul(patches, w, shift, residual=None, res_w=None, *,
                       apply_relu, out_cols):
    """patches (M,K) bf16; w (K,Cout) bf16 with BN scale pre-folded;
    shift (Cout,) f32 fused bias/BN shift.
    residual: None | (M, Cr).  If res_w is None it is added directly,
    otherwise residual @ res_w (fused 1x1 shortcut conv) is added.
    Returns (M, out_cols) float32."""
    M, K = patches.shape
    Cout = w.shape[1]
    res_mode = 0 if residual is None else (1 if res_w is None else 2)

    # Lane-dense output channels and (8,128)-aligned tiles.
    CP = _round_up(Cout, 128)
    Kp = _round_up(K, 128)
    TK = _pick_tile(Kp, 1024, 128)
    TM = min(512, _round_up(M, 8))
    Mp = _round_up(M, TM)

    p_pad = _pad2(patches, Mp, Kp)
    w_pad = _pad2(w, Kp, CP)
    shift_pad = _pad2(shift.astype(jnp.float32).reshape(1, Cout), 1, CP)

    vmem = pltpu.MemorySpace.VMEM
    in_specs = [
        pl.BlockSpec((TM, TK), lambda i, k: (i, k), memory_space=vmem),
        pl.BlockSpec((TK, CP), lambda i, k: (k, 0), memory_space=vmem),
        pl.BlockSpec((1, CP), lambda i, k: (0, 0), memory_space=vmem),
    ]
    args = [p_pad, w_pad, shift_pad]

    CR = 0
    if res_mode >= 1:
        CR = _round_up(residual.shape[1], 128)
        res_pad = _pad2(residual, Mp, CR)
        in_specs.append(pl.BlockSpec((TM, CR), lambda i, k: (i, 0),
                                     memory_space=vmem))
        args.append(res_pad)
    if res_mode == 2:
        rw_pad = _pad2(res_w, CR, CP)
        in_specs.append(pl.BlockSpec((CR, CP), lambda i, k: (0, 0),
                                     memory_space=vmem))
        args.append(rw_pad)

    out_spec = pl.BlockSpec((TM, CP), lambda i, k: (i, 0), memory_space=vmem)

    # Scheduler hints + explicit VMEM budget (sized for the chosen tiles,
    # well under v7x's 64 MiB per-TC VMEM).
    flops = 2 * Mp * Kp * CP + (2 * Mp * CR * CP if res_mode == 2 else 0)
    bytes_accessed = sum(int(a.size) * a.dtype.itemsize for a in args)
    bytes_accessed += Mp * CP * 4
    vmem_need = (2 * (TM * TK * 2 + TK * CP * 2 + TM * CP * 4)
                 + TM * CP * 4 + 2 * CP * 4)
    if res_mode >= 1:
        vmem_need += 2 * TM * CR * args[3].dtype.itemsize
    if res_mode == 2:
        vmem_need += 2 * CR * CP * 2
    vmem_limit = min(2 * vmem_need + (8 << 20), 48 << 20)

    out = pl.pallas_call(
        _make_kernel(apply_relu, res_mode),
        out_shape=jax.ShapeDtypeStruct((Mp, CP), jnp.float32),
        grid_spec=pltpu.PrefetchScalarGridSpec(
            num_scalar_prefetch=0,
            grid=(Mp // TM, Kp // TK),
            in_specs=in_specs,
            out_specs=out_spec,
            scratch_shapes=[pltpu.VMEM((TM, CP), jnp.float32)],
        ),
        compiler_params=pltpu.CompilerParams(
            dimension_semantics=("parallel", "arbitrary"),
            vmem_limit_bytes=int(vmem_limit),
        ),
        cost_estimate=pl.CostEstimate(
            flops=int(flops), transcendentals=0,
            bytes_accessed=int(bytes_accessed)),
    )(*args)

    return out[:M, :out_cols]


# ----------------------------------------------------------------------------
# BasicBlock forward (ResNet), NCHW in / NCHW out like PyTorch
# ----------------------------------------------------------------------------
def basic_block_forward(x_nchw, params, stride):
    x = jnp.transpose(x_nchw, (0, 2, 3, 1)).astype(jnp.float32)   # NCHW->NHWC
    N, H, W, Cin = x.shape
    Cout = params["conv1_w"].shape[0]
    x_bf = x.astype(jnp.bfloat16)

    # ---- conv1 (3x3, stride) + bias + bn1 + relu   — one Pallas call -------
    s1, t1 = _bn_fold(params["bn1_gamma"], params["bn1_beta"],
                      params["bn1_mean"], params["bn1_var"])
    w1 = params["conv1_w"].transpose(2, 3, 1, 0).reshape(9 * Cin, Cout)
    w1s = (w1 * s1[None, :]).astype(jnp.bfloat16)        # BN scale folded in
    shift1 = params["conv1_b"] * s1 + t1                 # bias + BN shift

    p1, (n1, ho1, wo1) = _im2col_3x3(x_bf, stride)
    out1 = _fused_conv_matmul(p1, w1s, shift1, apply_relu=True, out_cols=Cout)
    out1_nhwc = out1.reshape(n1, ho1, wo1, Cout)

    # ---- conv2 (3x3, s=1) + bias + bn2 + shortcut + relu — one Pallas call --
    s2, t2 = _bn_fold(params["bn2_gamma"], params["bn2_beta"],
                      params["bn2_mean"], params["bn2_var"])
    w2 = params["conv2_w"].transpose(2, 3, 1, 0).reshape(9 * Cout, Cout)
    w2s = (w2 * s2[None, :]).astype(jnp.bfloat16)
    shift2 = params["conv2_b"] * s2 + t2

    p2, (n2, ho2, wo2) = _im2col_3x3(out1_nhwc.astype(jnp.bfloat16), 1)

    if stride != 1 or Cin != Cout:
        # 1x1 shortcut conv fused into the conv2 kernel as a second dot.
        res = x_bf[:, ::stride, ::stride, :].reshape(-1, Cin)
        rw = params["sc_w"].reshape(Cout, Cin).T.astype(jnp.bfloat16)
        shift2 = shift2 + params["sc_b"]                  # shortcut bias folded
        out2 = _fused_conv_matmul(p2, w2s, shift2, res, rw,
                                  apply_relu=True, out_cols=Cout)
    else:
        identity = x.reshape(-1, Cout)                    # exact f32 identity
        out2 = _fused_conv_matmul(p2, w2s, shift2, identity,
                                  apply_relu=True, out_cols=Cout)

    out_nhwc = out2.reshape(n2, ho2, wo2, Cout)
    return jnp.transpose(out_nhwc, (0, 3, 1, 2))          # NHWC -> NCHW


# ----------------------------------------------------------------------------
# Pure-JAX f32 reference (lax conv) for correctness checking
# ----------------------------------------------------------------------------
def _reference_forward(x_nchw, params, stride, eps=1e-5):
    dn = ("NHWC", "HWIO", "NHWC")
    x = jnp.transpose(x_nchw, (0, 2, 3, 1))

    def conv(inp, w_oihw, b, s, pad):
        w = w_oihw.transpose(2, 3, 1, 0)
        y = jax.lax.conv_general_dilated(inp, w, (s, s), pad,
                                         dimension_numbers=dn)
        return y + b

    def bn(y, g, bta, m, v):
        return (y - m) / jnp.sqrt(v + eps) * g + bta

    o = conv(x, params["conv1_w"], params["conv1_b"], stride, [(1, 1), (1, 1)])
    o = jax.nn.relu(bn(o, params["bn1_gamma"], params["bn1_beta"],
                       params["bn1_mean"], params["bn1_var"]))
    o = conv(o, params["conv2_w"], params["conv2_b"], 1, [(1, 1), (1, 1)])
    o = bn(o, params["bn2_gamma"], params["bn2_beta"],
           params["bn2_mean"], params["bn2_var"])
    Cin, Cout = x.shape[-1], params["conv1_w"].shape[0]
    if stride != 1 or Cin != Cout:
        ident = conv(x, params["sc_w"], params["sc_b"], stride,
                     [(0, 0), (0, 0)])
    else:
        ident = x
    o = jax.nn.relu(o + ident)
    return jnp.transpose(o, (0, 3, 1, 2))


def _make_params(key, Cin, Cout, with_shortcut):
    ks = jax.random.split(key, 14)
    p = {
        "conv1_w": 0.1 * jax.random.normal(ks[0], (Cout, Cin, 3, 3), jnp.float32),
        "conv1_b": 0.1 * jax.random.normal(ks[1], (Cout,), jnp.float32),
        "bn1_gamma": 1.0 + 0.1 * jax.random.normal(ks[2], (Cout,), jnp.float32),
        "bn1_beta": 0.1 * jax.random.normal(ks[3], (Cout,), jnp.float32),
        "bn1_mean": 0.1 * jax.random.normal(ks[4], (Cout,), jnp.float32),
        "bn1_var": jnp.abs(1.0 + 0.1 * jax.random.normal(ks[5], (Cout,), jnp.float32)),
        "conv2_w": 0.1 * jax.random.normal(ks[6], (Cout, Cout, 3, 3), jnp.float32),
        "conv2_b": 0.1 * jax.random.normal(ks[7], (Cout,), jnp.float32),
        "bn2_gamma": 1.0 + 0.1 * jax.random.normal(ks[8], (Cout,), jnp.float32),
        "bn2_beta": 0.1 * jax.random.normal(ks[9], (Cout,), jnp.float32),
        "bn2_mean": 0.1 * jax.random.normal(ks[10], (Cout,), jnp.float32),
        "bn2_var": jnp.abs(1.0 + 0.1 * jax.random.normal(ks[11], (Cout,), jnp.float32)),
    }
    if with_shortcut:
        p["sc_w"] = 0.1 * jax.random.normal(ks[12], (Cout, Cin, 1, 1), jnp.float32)
        p["sc_b"] = 0.1 * jax.random.normal(ks[13], (Cout,), jnp.float32)
    return p


if __name__ == "__main__":
    fwd = jax.jit(basic_block_forward, static_argnums=2)

    # Case 1: downsampling block (stride=2, Cin != Cout) -> fused 1x1 shortcut.
    N, Cin, H, W, Cout, stride = 2, 4, 16, 16, 8, 2
    kx, kp = jax.random.split(jax.random.PRNGKey(0))
    x = jax.random.normal(kx, (N, Cin, H, W), jnp.float32)
    params = _make_params(kp, Cin, Cout, with_shortcut=True)

    out = jax.block_until_ready(fwd(x, params, stride))
    ref = _reference_forward(x, params, stride)
    assert out.shape == (N, Cout, H // stride, W // stride)
    assert jnp.allclose(out, ref, atol=5e-2, rtol=5e-2), \
        float(jnp.max(jnp.abs(out - ref)))

    # Case 2: identity block (stride=1, Cin == Cout) -> direct residual add.
    x2 = jax.random.normal(jax.random.PRNGKey(1), (N, Cout, H, W), jnp.float32)
    params2 = _make_params(jax.random.PRNGKey(2), Cout, Cout, with_shortcut=False)
    out2 = jax.block_until_ready(fwd(x2, params2, 1))
    ref2 = _reference_forward(x2, params2, 1)
    assert out2.shape == (N, Cout, H, W)
    assert jnp.allclose(out2, ref2, atol=5e-2, rtol=5e-2), \
        float(jnp.max(jnp.abs(out2 - ref2)))

    print("KERNEL_OK")
</pallas_src>

<mosaic_0001>
module attributes {stable_mosaic.version = 11 : i64} {
  func.func @kernel(%arg0: i32, %arg1: i32, %arg2: memref<128x128xbf16, #tpu.memory_space<vmem>>, %arg3: memref<128x128xbf16, #tpu.memory_space<vmem>>, %arg4: memref<1x128xf32, #tpu.memory_space<vmem>>, %arg5: memref<128x128xf32, #tpu.memory_space<vmem>>, %arg6: memref<128x128xf32, #tpu.memory_space<vmem>>) attributes {dimension_semantics = [#tpu.dimension_semantics<parallel>, #tpu.dimension_semantics<arbitrary>], iteration_bounds = array<i64: 1, 1>, scalar_prefetch = 0 : i64, scratch_operands = 1 : i64, tpu.core_type = #tpu.core_type<tc>, window_params = [{transform_indices = @transform_0, window_bounds = array<i64: 128, 128>}, {transform_indices = @transform_1, window_bounds = array<i64: 128, 128>}, {pipeline_mode = #tpu.pipeline_mode<synchronous>, transform_indices = @transform_2, window_bounds = array<i64: 1, 128>}, {transform_indices = @transform_3, window_bounds = array<i64: 128, 128>}]} {
    %c0_i32 = arith.constant 0 : i32
    %0 = arith.cmpi eq, %arg1, %c0_i32 : i32
    %1 = arith.extui %0 : i1 to i32
    %c0_i32_0 = arith.constant 0 : i32
    %2 = arith.cmpi ne, %1, %c0_i32_0 : i32
    scf.if %2 {
      %cst_10 = arith.constant 0.000000e+00 : f32
      %12 = vector.broadcast %cst_10 : f32 to vector<128x128xf32>
      %c0_11 = arith.constant 0 : index
      %c0_12 = arith.constant 0 : index
      %13 = vector.load %arg6[%c0_11, %c0_12] : memref<128x128xf32, #tpu.memory_space<vmem>>, vector<128x128xf32>
      tpu.vector_store %arg6[%c0_11, %c0_12], %12 {strides = array<i32>} : memref<128x128xf32, #tpu.memory_space<vmem>>, vector<128x128xf32>,
    } else {
    }
    %c0 = arith.constant 0 : index
    %c0_1 = arith.constant 0 : index
    %3 = vector.load %arg6[%c0, %c0_1] : memref<128x128xf32, #tpu.memory_space<vmem>>, vector<128x128xf32>
    %c0_2 = arith.constant 0 : index
    %c0_3 = arith.constant 0 : index
    %4 = vector.load %arg2[%c0_2, %c0_3] : memref<128x128xbf16, #tpu.memory_space<vmem>>, vector<128x128xbf16>
    %c0_4 = arith.constant 0 : index
    %c0_5 = arith.constant 0 : index
    %5 = vector.load %arg3[%c0_4, %c0_5] : memref<128x128xbf16, #tpu.memory_space<vmem>>, vector<128x128xbf16>
    %cst = arith.constant dense<0.000000e+00> : vector<128x128xf32>
    %6 = tpu.matmul %4, %5, %cst {dimension_numbers = #tpu.dot_dimension_numbers<[1], [0], [0], [1], [0, 0, 1, 1], [], []>} : vector<128x128xbf16>, vector<128x128xbf16>, vector<128x128xf32> -> vector<128x128xf32>
    %7 = arith.addf %3, %6 : vector<128x128xf32>
    %c0_6 = arith.constant 0 : index
    %c0_7 = arith.constant 0 : index
    %8 = vector.load %arg6[%c0_6, %c0_7] : memref<128x128xf32, #tpu.memory_space<vmem>>, vector<128x128xf32>
    tpu.vector_store %arg6[%c0_6, %c0_7], %7 {strides = array<i32>} : memref<128x128xf32, #tpu.memory_space<vmem>>, vector<128x128xf32>,
    %c0_i32_8 = arith.constant 0 : i32
    %9 = arith.cmpi eq, %arg1, %c0_i32_8 : i32
    %10 = arith.extui %9 : i1 to i32
    %c0_i32_9 = arith.constant 0 : i32
    %11 = arith.cmpi ne, %10, %c0_i32_9 : i32
    scf.if %11 {
      %c0_10 = arith.constant 0 : index
      %c0_11 = arith.constant 0 : index
      %12 = vector.load %arg6[%c0_10, %c0_11] : memref<128x128xf32, #tpu.memory_space<vmem>>, vector<128x128xf32>
      %c0_12 = arith.constant 0 : index
      %c0_13 = arith.constant 0 : index
      %13 = vector.load %arg4[%c0_12, %c0_13] : memref<1x128xf32, #tpu.memory_space<vmem>>, vector<1x128xf32>
      %14 = vector.broadcast %13 : vector<1x128xf32> to vector<128x128xf32>
      %15 = arith.addf %12, %14 : vector<128x128xf32>
      %cst_14 = arith.constant 0.000000e+00 : f32
      %16 = vector.broadcast %cst_14 : f32 to vector<128x128xf32>
      %17 = arith.maximumf %15, %16 : vector<128x128xf32>
      %c0_15 = arith.constant 0 : index
      %c0_16 = arith.constant 0 : index
      %18 = vector.load %arg5[%c0_15, %c0_16] : memref<128x128xf32, #tpu.memory_space<vmem>>, vector<128x128xf32>
      tpu.vector_store %arg5[%c0_15, %c0_16], %17 {strides = array<i32>} : memref<128x128xf32, #tpu.memory_space<vmem>>, vector<128x128xf32>,
    } else {
    }
    return
  }
  func.func @transform_0(%arg0: i32, %arg1: i32) -> (i32, i32) {
    %c0_i32 = arith.constant 0 : i32
    return %arg0, %arg1 : i32, i32
  }
  func.func @transform_1(%arg0: i32, %arg1: i32) -> (i32, i32) {
    %c0_i32 = arith.constant 0 : i32
    %c0_i32_0 = arith.constant 0 : i32
    return %arg1, %c0_i32 : i32, i32
  }
  func.func @transform_2(%arg0: i32, %arg1: i32) -> (i32, i32) {
    %c0_i32 = arith.constant 0 : i32
    %c0_i32_0 = arith.constant 0 : i32
    %c0_i32_1 = arith.constant 0 : i32
    return %c0_i32, %c0_i32_0 : i32, i32
  }
  func.func @transform_3(%arg0: i32, %arg1: i32) -> (i32, i32) {
    %c0_i32 = arith.constant 0 : i32
    %c0_i32_0 = arith.constant 0 : i32
    return %arg0, %c0_i32 : i32, i32
  }
}

module attributes {stable_mosaic.version = 11 : i64} {
  func.func @kernel(%arg0: i32, %arg1: i32, %arg2: memref<128x128xbf16, #tpu.memory_space<vmem>>, %arg3: memref<128x128xbf16, #tpu.memory_space<vmem>>, %arg4: memref<1x128xf32, #tpu.memory_space<vmem>>, %arg5: memref<128x128xbf16, #tpu.memory_space<vmem>>, %arg6: memref<128x128xbf16, #tpu.memory_space<vmem>>, %arg7: memref<128x128xf32, #tpu.memory_space<vmem>>, %arg8: memref<128x128xf32, #tpu.memory_space<vmem>>) attributes {dimension_semantics = [#tpu.dimension_semantics<parallel>, #tpu.dimension_semantics<arbitrary>], iteration_bounds = array<i64: 1, 1>, scalar_prefetch = 0 : i64, scratch_operands = 1 : i64, tpu.core_type = #tpu.core_type<tc>, window_params = [{transform_indices = @transform_0, window_bounds = array<i64: 128, 128>}, {transform_indices = @transform_1, window_bounds = array<i64: 128, 128>}, {pipeline_mode = #tpu.pipeline_mode<synchronous>, transform_indices = @transform_2, window_bounds = array<i64: 1, 128>}, {transform_indices = @transform_3, window_bounds = array<i64: 128, 128>}, {pipeline_mode = #tpu.pipeline_mode<synchronous>, transform_indices = @transform_4, window_bounds = array<i64: 128, 128>}, {transform_indices = @transform_5, window_bounds = array<i64: 128, 128>}]} {
    %c0_i32 = arith.constant 0 : i32
    %0 = arith.cmpi eq, %arg1, %c0_i32 : i32
    %1 = arith.extui %0 : i1 to i32
    %c0_i32_0 = arith.constant 0 : i32
    %2 = arith.cmpi ne, %1, %c0_i32_0 : i32
    scf.if %2 {
      %cst_10 = arith.constant 0.000000e+00 : f32
      %12 = vector.broadcast %cst_10 : f32 to vector<128x128xf32>
      %c0_11 = arith.constant 0 : index
      %c0_12 = arith.constant 0 : index
      %13 = vector.load %arg8[%c0_11, %c0_12] : memref<128x128xf32, #tpu.memory_space<vmem>>, vector<128x128xf32>
      tpu.vector_store %arg8[%c0_11, %c0_12], %12 {strides = array<i32>} : memref<128x128xf32, #tpu.memory_space<vmem>>, vector<128x128xf32>,
    } else {
    }
    %c0 = arith.constant 0 : index
    %c0_1 = arith.constant 0 : index
    %3 = vector.load %arg8[%c0, %c0_1] : memref<128x128xf32, #tpu.memory_space<vmem>>, vector<128x128xf32>
    %c0_2 = arith.constant 0 : index
    %c0_3 = arith.constant 0 : index
    %4 = vector.load %arg2[%c0_2, %c0_3] : memref<128x128xbf16, #tpu.memory_space<vmem>>, vector<128x128xbf16>
    %c0_4 = arith.constant 0 : index
    %c0_5 = arith.constant 0 : index
    %5 = vector.load %arg3[%c0_4, %c0_5] : memref<128x128xbf16, #tpu.memory_space<vmem>>, vector<128x128xbf16>
    %cst = arith.constant dense<0.000000e+00> : vector<128x128xf32>
    %6 = tpu.matmul %4, %5, %cst {dimension_numbers = #tpu.dot_dimension_numbers<[1], [0], [0], [1], [0, 0, 1, 1], [], []>} : vector<128x128xbf16>, vector<128x128xbf16>, vector<128x128xf32> -> vector<128x128xf32>
    %7 = arith.addf %3, %6 : vector<128x128xf32>
    %c0_6 = arith.constant 0 : index
    %c0_7 = arith.constant 0 : index
    %8 = vector.load %arg8[%c0_6, %c0_7] : memref<128x128xf32, #tpu.memory_space<vmem>>, vector<128x128xf32>
    tpu.vector_store %arg8[%c0_6, %c0_7], %7 {strides = array<i32>} : memref<128x128xf32, #tpu.memory_space<vmem>>, vector<128x128xf32>,
    %c0_i32_8 = arith.constant 0 : i32
    %9 = arith.cmpi eq, %arg1, %c0_i32_8 : i32
    %10 = arith.extui %9 : i1 to i32
    %c0_i32_9 = arith.constant 0 : i32
    %11 = arith.cmpi ne, %10, %c0_i32_9 : i32
    scf.if %11 {
      %c0_10 = arith.constant 0 : index
      %c0_11 = arith.constant 0 : index
      %12 = vector.load %arg8[%c0_10, %c0_11] : memref<128x128xf32, #tpu.memory_space<vmem>>, vector<128x128xf32>
      %c0_12 = arith.constant 0 : index
      %c0_13 = arith.constant 0 : index
      %13 = vector.load %arg4[%c0_12, %c0_13] : memref<1x128xf32, #tpu.memory_space<vmem>>, vector<1x128xf32>
      %14 = vector.broadcast %13 : vector<1x128xf32> to vector<128x128xf32>
      %15 = arith.addf %12, %14 : vector<128x128xf32>
      %c0_14 = arith.constant 0 : index
      %c0_15 = arith.constant 0 : index
      %16 = vector.load %arg5[%c0_14, %c0_15] : memref<128x128xbf16, #tpu.memory_space<vmem>>, vector<128x128xbf16>
      %c0_16 = arith.constant 0 : index
      %c0_17 = arith.constant 0 : index
      %17 = vector.load %arg6[%c0_16, %c0_17] : memref<128x128xbf16, #tpu.memory_space<vmem>>, vector<128x128xbf16>
      %cst_18 = arith.constant dense<0.000000e+00> : vector<128x128xf32>
      %18 = tpu.matmul %16, %17, %cst_18 {dimension_numbers = #tpu.dot_dimension_numbers<[1], [0], [0], [1], [0, 0, 1, 1], [], []>} : vector<128x128xbf16>, vector<128x128xbf16>, vector<128x128xf32> -> vector<128x128xf32>
      %19 = arith.addf %15, %18 : vector<128x128xf32>
      %cst_19 = arith.constant 0.000000e+00 : f32
      %20 = vector.broadcast %cst_19 : f32 to vector<128x128xf32>
      %21 = arith.maximumf %19, %20 : vector<128x128xf32>
      %c0_20 = arith.constant 0 : index
      %c0_21 = arith.constant 0 : index
      %22 = vector.load %arg7[%c0_20, %c0_21] : memref<128x128xf32, #tpu.memory_space<vmem>>, vector<128x128xf32>
      tpu.vector_store %arg7[%c0_20, %c0_21], %21 {strides = array<i32>} : memref<128x128xf32, #tpu.memory_space<vmem>>, vector<128x128xf32>,
    } else {
    }
    return
  }
  func.func @transform_0(%arg0: i32, %arg1: i32) -> (i32, i32) {
    %c0_i32 = arith.constant 0 : i32
    return %arg0, %arg1 : i32, i32
  }
  func.func @transform_1(%arg0: i32, %arg1: i32) -> (i32, i32) {
    %c0_i32 = arith.constant 0 : i32
    %c0_i32_0 = arith.constant 0 : i32
    return %arg1, %c0_i32 : i32, i32
  }
  func.func @transform_2(%arg0: i32, %arg1: i32) -> (i32, i32) {
    %c0_i32 = arith.constant 0 : i32
    %c0_i32_0 = arith.constant 0 : i32
    %c0_i32_1 = arith.constant 0 : i32
    return %c0_i32, %c0_i32_0 : i32, i32
  }
  func.func @transform_3(%arg0: i32, %arg1: i32) -> (i32, i32) {
    %c0_i32 = arith.constant 0 : i32
    %c0_i32_0 = arith.constant 0 : i32
    return %arg0, %c0_i32 : i32, i32
  }
  func.func @transform_4(%arg0: i32, %arg1: i32) -> (i32, i32) {
    %c0_i32 = arith.constant 0 : i32
    %c0_i32_0 = arith.constant 0 : i32
    %c0_i32_1 = arith.constant 0 : i32
    return %c0_i32, %c0_i32_0 : i32, i32
  }
  func.func @transform_5(%arg0: i32, %arg1: i32) -> (i32, i32) {
    %c0_i32 = arith.constant 0 : i32
    %c0_i32_0 = arith.constant 0 : i32
    return %arg0, %c0_i32 : i32, i32
  }
}

</mosaic_0001>

<llo_original>
// kernel: basic_block_forward.2
$region0: #{basic_block_forward.2}
  #allocation0 [shape = 'u32[]', space=smem, size = 0x4, offset = 0x4, fixed_abs, tag = 'smem constant byte address 0x4 - core index']
  #allocation1 [shape = 'u32[144,128]{1,0:T(1,128)}', space=vmem, size = 0x12000, scoped, tag = 'internal scratch']
  #allocation2 [shape = 'f32[128,128]{1,0:T(8,128)}', space=vmem, size = 0x10000, scoped, tag = 'scratch operand']
  %s0 = inlined_call_operand.vmem [shape: bf16[128,128], index: 0, kind: input, shape index: {}]
  %s1 = inlined_call_operand.vmem [shape: bf16[128,128], index: 1, kind: input, shape index: {}]
  %s2 = inlined_call_operand.vmem [shape: f32[1,128], index: 2, kind: input, shape index: {}]
  %s3 = inlined_call_operand.vmem [shape: f32[128,128], index: 3, kind: output, shape index: {}]
  %s4 = sld [smem:[#allocation0]]
  $region30: #{basic_block_forward.2} parent=0
    _
  %s6 = ssub.s32 1, %s4
  %s7 = scalar_select 0, %s6, %s4
  // Predicated region
  $region2: #{basic_block_forward.2} parent=0 // pred_check
    _
  $region3: #{basic_block_forward.2} parent=0 // pred_check_branch
    %9 = sbr.rel (0) target = $region5
  $region4: #{basic_block_forward.2} parent=0 // pred_region
    _
  $region5: #{basic_block_forward.2} parent=0 // pred_fallthru
    _
  // Predicated region
  $region6: #{basic_block_forward.2} parent=0 // pred_check
    _
  $region7: #{basic_block_forward.2} parent=0 // pred_check_branch
    %11 = sbr.rel (0) target = $region9
  $region8: #{basic_block_forward.2} parent=0 // pred_region
    _
  $region9: #{basic_block_forward.2} parent=0 // pred_fallthru
    _
  // Predicated region
  $region10: #{basic_block_forward.2} parent=0 // pred_check
    _
  $region11: #{basic_block_forward.2} parent=0 // pred_check_branch
    %13 = sbr.rel (0) target = $region13
  $region12: #{basic_block_forward.2} parent=0 // pred_region
    _
  $region13: #{basic_block_forward.2} parent=0 // pred_fallthru
    _
  %p15 = scmp.eq.s32.totalorder 0, 0
  // Predicated region
  $region14: #{basic_block_forward.2} parent=0 // pred_check
    %p16 = pneg %p15
  $region15: #{basic_block_forward.2} parent=0 // pred_check_branch
    %18 = sbr.rel (%p16) target = $region17
  $region16: #{basic_block_forward.2} parent=0 // pred_region
    %19 = vst [vmem:[#allocation2] sm:$0xff] 0.0
    %20 = vst [vmem:[#allocation2 + $0x8] sm:$0xff] 0.0
    %21 = vst [vmem:[#allocation2 + $0x10] sm:$0xff] 0.0
    %22 = vst [vmem:[#allocation2 + $0x18] sm:$0xff] 0.0
    %23 = vst [vmem:[#allocation2 + $0x20] sm:$0xff] 0.0
    %24 = vst [vmem:[#allocation2 + $0x28] sm:$0xff] 0.0
    %25 = vst [vmem:[#allocation2 + $0x30] sm:$0xff] 0.0
    %26 = vst [vmem:[#allocation2 + $0x38] sm:$0xff] 0.0
    %27 = vst [vmem:[#allocation2 + $0x40] sm:$0xff] 0.0
    %28 = vst [vmem:[#allocation2 + $0x48] sm:$0xff] 0.0
    %29 = vst [vmem:[#allocation2 + $0x50] sm:$0xff] 0.0
    %30 = vst [vmem:[#allocation2 + $0x58] sm:$0xff] 0.0
    %31 = vst [vmem:[#allocation2 + $0x60] sm:$0xff] 0.0
    %32 = vst [vmem:[#allocation2 + $0x68] sm:$0xff] 0.0
    %33 = vst [vmem:[#allocation2 + $0x70] sm:$0xff] 0.0
    %34 = vst [vmem:[#allocation2 + $0x78] sm:$0xff] 0.0
  $region17: #{basic_block_forward.2} parent=0 // pred_fallthru
    _
  %v35 = vld [vmem:[#allocation2] sm:$0xff]
  %v36 = vld [vmem:[#allocation2 + $0x8] sm:$0xff]
  %v37 = vld [vmem:[#allocation2 + $0x10] sm:$0xff]
  %v38 = vld [vmem:[#allocation2 + $0x18] sm:$0xff]
  %v39 = vld [vmem:[#allocation2 + $0x20] sm:$0xff]
  %v40 = vld [vmem:[#allocation2 + $0x28] sm:$0xff]
  %v41 = vld [vmem:[#allocation2 + $0x30] sm:$0xff]
  %v42 = vld [vmem:[#allocation2 + $0x38] sm:$0xff]
  %v43 = vld [vmem:[#allocation2 + $0x40] sm:$0xff]
  %v44 = vld [vmem:[#allocation2 + $0x48] sm:$0xff]
  %v45 = vld [vmem:[#allocation2 + $0x50] sm:$0xff]
  %v46 = vld [vmem:[#allocation2 + $0x58] sm:$0xff]
  %v47 = vld [vmem:[#allocation2 + $0x60] sm:$0xff]
  %v48 = vld [vmem:[#allocation2 + $0x68] sm:$0xff]
  %v49 = vld [vmem:[#allocation2 + $0x70] sm:$0xff]
  %v50 = vld [vmem:[#allocation2 + $0x78] sm:$0xff]
  %v51 = vld [vmem:[%s0] sm:$0xf]
  %v52 = vld [vmem:[%s0 + $0x4] sm:$0xf]
  %v53 = vld [vmem:[%s0 + $0x8] sm:$0xf]
  %v54 = vld [vmem:[%s0 + $0xc] sm:$0xf]
  %v55 = vld [vmem:[%s0 + $0x10] sm:$0xf]
  %v56 = vld [vmem:[%s0 + $0x14] sm:$0xf]
  %v57 = vld [vmem:[%s0 + $0x18] sm:$0xf]
  %v58 = vld [vmem:[%s0 + $0x1c] sm:$0xf]
  %v59 = vld [vmem:[%s0 + $0x20] sm:$0xf]
  %v60 = vld [vmem:[%s0 + $0x24] sm:$0xf]
  %v61 = vld [vmem:[%s0 + $0x28] sm:$0xf]
  %v62 = vld [vmem:[%s0 + $0x2c] sm:$0xf]
  %v63 = vld [vmem:[%s0 + $0x30] sm:$0xf]
  %v64 = vld [vmem:[%s0 + $0x34] sm:$0xf]
  %v65 = vld [vmem:[%s0 + $0x38] sm:$0xf]
  %v66 = vld [vmem:[%s0 + $0x3c] sm:$0xf]
  %v67 = vld [vmem:[%s1] sm:$0xf]
  %v68 = vld [vmem:[%s1 + $0x4] sm:$0xf]
  %v69 = vld [vmem:[%s1 + $0x8] sm:$0xf]
  %v70 = vld [vmem:[%s1 + $0xc] sm:$0xf]
  %v71 = vld [vmem:[%s1 + $0x10] sm:$0xf]
  %v72 = vld [vmem:[%s1 + $0x14] sm:$0xf]
  %v73 = vld [vmem:[%s1 + $0x18] sm:$0xf]
  %v74 = vld [vmem:[%s1 + $0x1c] sm:$0xf]
  %v75 = vld [vmem:[%s1 + $0x20] sm:$0xf]
  %v76 = vld [vmem:[%s1 + $0x24] sm:$0xf]
  %v77 = vld [vmem:[%s1 + $0x28] sm:$0xf]
  %v78 = vld [vmem:[%s1 + $0x2c] sm:$0xf]
  %v79 = vld [vmem:[%s1 + $0x30] sm:$0xf]
  %v80 = vld [vmem:[%s1 + $0x34] sm:$0xf]
  %v81 = vld [vmem:[%s1 + $0x38] sm:$0xf]
  %v82 = vld [vmem:[%s1 + $0x3c] sm:$0xf]
  %v99 = vunpack.c.l.b16 %v51
  %v100 = vunpack.c.l.b16 %v52
  %v101 = vunpack.c.l.b16 %v53
  %v102 = vunpack.c.l.b16 %v54
  %v103 = vunpack.c.l.b16 %v55
  %v104 = vunpack.c.l.b16 %v56
  %v105 = vunpack.c.l.b16 %v57
  %v106 = vunpack.c.l.b16 %v58
  %v107 = vunpack.c.l.b16 %v59
  %v108 = vunpack.c.l.b16 %v60
  %v109 = vunpack.c.l.b16 %v61
  %v110 = vunpack.c.l.b16 %v62
  %v111 = vunpack.c.l.b16 %v63
  %v112 = vunpack.c.l.b16 %v64
  %v113 = vunpack.c.l.b16 %v65
  %v114 = vunpack.c.l.b16 %v66
  %v115 = vpack.c.b16 %v100, %v99
  %v116 = vpack.c.b16 %v102, %v101
  %v117 = vpack.c.b16 %v104, %v103
  %v118 = vpack.c.b16 %v106, %v105
  %v119 = vpack.c.b16 %v108, %v107
  %v120 = vpack.c.b16 %v110, %v109
  %v121 = vpack.c.b16 %v112, %v111
  %v122 = vpack.c.b16 %v114, %v113
  %v147 = vunpack.c.l.b16 %v67
  %v148 = vunpack.c.l.b16 %v68
  %v149 = vunpack.c.l.b16 %v69
  %v150 = vunpack.c.l.b16 %v70
  %v151 = vunpack.c.l.b16 %v71
  %v152 = vunpack.c.l.b16 %v72
  %v153 = vunpack.c.l.b16 %v73
  %v154 = vunpack.c.l.b16 %v74
  %v155 = vunpack.c.l.b16 %v75
  %v156 = vunpack.c.l.b16 %v76
  %v157 = vunpack.c.l.b16 %v77
  %v158 = vunpack.c.l.b16 %v78
  %v159 = vunpack.c.l.b16 %v79
  %v160 = vunpack.c.l.b16 %v80
  %v161 = vunpack.c.l.b16 %v81
  %v162 = vunpack.c.l.b16 %v82
  %v163 = vpack.c.b16 %v148, %v147
  %v164 = vpack.c.b16 %v150, %v149
  %v165 = vpack.c.b16 %v152, %v151
  %v166 = vpack.c.b16 %v154, %v153
  %v167 = vpack.c.b16 %v156, %v155
  %v168 = vpack.c.b16 %v158, %v157
  %v169 = vpack.c.b16 %v160, %v159
  %v170 = vpack.c.b16 %v162, %v161
  %179 = vmatprep.subr.bf16.mxu0 0
  %180 = vmatpush1.bf16.msra.mxu0 %v163
  %181 = vmatprep.subr.bf16.mxu0 0
  %182 = vmatpush1.bf16.msra.mxu0 %v164
  %183 = vmatprep.subr.bf16.mxu0 0
  %184 = vmatpush1.bf16.msra.mxu0 %v165
  %185 = vmatprep.subr.bf16.mxu0 0
  %186 = vmatpush1.bf16.msra.mxu0 %v166
  %187 = vmatprep.subr.bf16.mxu0 0
  %188 = vmatpush1.bf16.msra.mxu0 %v167
  %189 = vmatprep.subr.bf16.mxu0 0
  %190 = vmatpush1.bf16.msra.mxu0 %v168
  %191 = vmatprep.subr.bf16.mxu0 0
  %192 = vmatpush1.bf16.msra.mxu0 %v169
  %193 = vmatprep.subr.bf16.mxu0 0
  %194 = vmatpush1.bf16.msra.mxu0 %v170
  %195 = vmatprep.subr.bf16.mxu0 0
  %196 = vmatpush1.bf16.msra.mxu0 0
  %197 = vmatprep.subr.bf16.mxu0 0
  %198 = vmatpush1.bf16.msra.mxu0 0
  %199 = vmatprep.subr.bf16.mxu0 0
  %200 = vmatpush1.bf16.msra.mxu0 0
  %201 = vmatprep.subr.bf16.mxu0 0
  %202 = vmatpush1.bf16.msra.mxu0 0
  %203 = vmatprep.subr.bf16.mxu0 0
  %204 = vmatpush1.bf16.msra.mxu0 0
  %205 = vmatprep.subr.bf16.mxu0 0
  %206 = vmatpush1.bf16.msra.mxu0 0
  %207 = vmatprep.subr.bf16.mxu0 0
  %208 = vmatpush1.bf16.msra.mxu0 0
  %209 = vmatprep.subr.bf16.mxu0 0
  %210 = vmatpush1.bf16.msra.mxu0 0
  %211 = vmatprep.mubr.bf16.mxu0 0
  %212 = vmatmul.mubr.bf16.gmra.mrb[0].mxu0 %v115
  %v213 = vpop.f32.mrb[0].mxu0
  %v214 = vadd.f32 0.0, %v213
  %v215 = vpop.f32.mrb[0].mxu0
  %v216 = vpop.f32.mrb[0].mxu0
  %v217 = vadd.f32 0.0, %v216
  %v218 = vpop.f32.mrb[0].mxu0
  %219 = vmatprep.mubr.bf16.mxu0 0
  %220 = vmatmul.mubr.bf16.gmra.mrb[0].mxu0 %v116
  %v221 = vpop.f32.mrb[0].mxu0
  %v222 = vadd.f32 0.0, %v221
  %v223 = vpop.f32.mrb[0].mxu0
  %v224 = vpop.f32.mrb[0].mxu0
  %v225 = vadd.f32 0.0, %v224
  %v226 = vpop.f32.mrb[0].mxu0
  %227 = vmatprep.mubr.bf16.mxu0 0
  %228 = vmatmul.mubr.bf16.gmra.mrb[0].mxu0 %v117
  %v229 = vpop.f32.mrb[0].mxu0
  %v230 = vadd.f32 0.0, %v229
  %v231 = vpop.f32.mrb[0].mxu0
  %v232 = vpop.f32.mrb[0].mxu0
  %v233 = vadd.f32 0.0, %v232
  %v234 = vpop.f32.mrb[0].mxu0
  %235 = vmatprep.mubr.bf16.mxu0 0
  %236 = vmatmul.mubr.bf16.gmra.mrb[0].mxu0 %v118
  %v237 = vpop.f32.mrb[0].mxu0
  %v238 = vadd.f32 0.0, %v237
  %v239 = vpop.f32.mrb[0].mxu0
  %v240 = vpop.f32.mrb[0].mxu0
  %v241 = vadd.f32 0.0, %v240
  %v242 = vpop.f32.mrb[0].mxu0
  %243 = vmatprep.mubr.bf16.mxu0 0
  %244 = vmatmul.mubr.bf16.gmra.mrb[0].mxu0 %v119
  %v245 = vpop.f32.mrb[0].mxu0
  %v246 = vadd.f32 0.0, %v245
  %v247 = vpop.f32.mrb[0].mxu0
  %v248 = vpop.f32.mrb[0].mxu0
  %v249 = vadd.f32 0.0, %v248
  %v250 = vpop.f32.mrb[0].mxu0
  %251 = vmatprep.mubr.bf16.mxu0 0
  %252 = vmatmul.mubr.bf16.gmra.mrb[0].mxu0 %v120
  %v253 = vpop.f32.mrb[0].mxu0
  %v254 = vadd.f32 0.0, %v253
  %v255 = vpop.f32.mrb[0].mxu0
  %v256 = vpop.f32.mrb[0].mxu0
  %v257 = vadd.f32 0.0, %v256
  %v258 = vpop.f32.mrb[0].mxu0
  %259 = vmatprep.mubr.bf16.mxu0 0
  %260 = vmatmul.mubr.bf16.gmra.mrb[0].mxu0 %v121
  %v261 = vpop.f32.mrb[0].mxu0
  %v262 = vadd.f32 0.0, %v261
  %v263 = vpop.f32.mrb[0].mxu0
  %v264 = vpop.f32.mrb[0].mxu0
  %v265 = vadd.f32 0.0, %v264
  %v266 = vpop.f32.mrb[0].mxu0
  %267 = vmatprep.mubr.bf16.mxu0 0
  %268 = vmatmul.mubr.bf16.gmra.mrb[0].mxu0 %v122
  %v269 = vpop.f32.mrb[0].mxu0
  %v270 = vadd.f32 0.0, %v269
  %v271 = vpop.f32.mrb[0].mxu0
  %v272 = vpop.f32.mrb[0].mxu0
  %v273 = vadd.f32 0.0, %v272
  %v274 = vpop.f32.mrb[0].mxu0
  %275 = vdwg.mxu0
  %v276 = vadd.f32 %v35, %v214
  %v277 = vadd.f32 %v36, %v217
  %v278 = vadd.f32 %v37, %v222
  %v279 = vadd.f32 %v38, %v225
  %v280 = vadd.f32 %v39, %v230
  %v281 = vadd.f32 %v40, %v233
  %v282 = vadd.f32 %v41, %v238
  %v283 = vadd.f32 %v42, %v241
  %v284 = vadd.f32 %v43, %v246
  %v285 = vadd.f32 %v44, %v249
  %v286 = vadd.f32 %v45, %v254
  %v287 = vadd.f32 %v46, %v257
  %v288 = vadd.f32 %v47, %v262
  %v289 = vadd.f32 %v48, %v265
  %v290 = vadd.f32 %v49, %v270
  %v291 = vadd.f32 %v50, %v273
  %292 = vst [vmem:[#allocation2] sm:$0xff] %v276
  %293 = vst [vmem:[#allocation2 + $0x8] sm:$0xff] %v277
  %294 = vst [vmem:[#allocation2 + $0x10] sm:$0xff] %v278
  %295 = vst [vmem:[#allocation2 + $0x18] sm:$0xff] %v279
  %296 = vst [vmem:[#allocation2 + $0x20] sm:$0xff] %v280
  %297 = vst [vmem:[#allocation2 + $0x28] sm:$0xff] %v281
  %298 = vst [vmem:[#allocation2 + $0x30] sm:$0xff] %v282
  %299 = vst [vmem:[#allocation2 + $0x38] sm:$0xff] %v283
  %300 = vst [vmem:[#allocation2 + $0x40] sm:$0xff] %v284
  %301 = vst [vmem:[#allocation2 + $0x48] sm:$0xff] %v285
  %302 = vst [vmem:[#allocation2 + $0x50] sm:$0xff] %v286
  %303 = vst [vmem:[#allocation2 + $0x58] sm:$0xff] %v287
  %304 = vst [vmem:[#allocation2 + $0x60] sm:$0xff] %v288
  %305 = vst [vmem:[#allocation2 + $0x68] sm:$0xff] %v289
  %306 = vst [vmem:[#allocation2 + $0x70] sm:$0xff] %v290
  %307 = vst [vmem:[#allocation2 + $0x78] sm:$0xff] %v291
  // Predicated region
  $region18: #{basic_block_forward.2} parent=0 // pred_check
    %p308 = pneg %p15
  $region19: #{basic_block_forward.2} parent=0 // pred_check_branch
    %310 = sbr.rel (%p308) target = $region21
  $region20: #{basic_block_forward.2} parent=0 // pred_region
    %v311 = vld [vmem:[#allocation2] sm:$0xff]
    %v312 = vld [vmem:[#allocation2 + $0x8] sm:$0xff]
    %v313 = vld [vmem:[#allocation2 + $0x10] sm:$0xff]
    %v314 = vld [vmem:[#allocation2 + $0x18] sm:$0xff]
    %v315 = vld [vmem:[#allocation2 + $0x20] sm:$0xff]
    %v316 = vld [vmem:[#allocation2 + $0x28] sm:$0xff]
    %v317 = vld [vmem:[#allocation2 + $0x30] sm:$0xff]
    %v318 = vld [vmem:[#allocation2 + $0x38] sm:$0xff]
    %v319 = vld [vmem:[#allocation2 + $0x40] sm:$0xff]
    %v320 = vld [vmem:[#allocation2 + $0x48] sm:$0xff]
    %v321 = vld [vmem:[#allocation2 + $0x50] sm:$0xff]
    %v322 = vld [vmem:[#allocation2 + $0x58] sm:$0xff]
    %v323 = vld [vmem:[#allocation2 + $0x60] sm:$0xff]
    %v324 = vld [vmem:[#allocation2 + $0x68] sm:$0xff]
    %v325 = vld [vmem:[#allocation2 + $0x70] sm:$0xff]
    %v326 = vld [vmem:[#allocation2 + $0x78] sm:$0xff]
    %v327 = vld [vmem:[%s2] sm:$0x1]
    %v329 = vlaneseq
    %v330 = vshrl.u32 %v329, 7
    %v331 = vsub.s32 0, %v330
    %v332 = vrot.slane %v327, %v331
    %v334 = vadd.f32 %v311, %v332
    %v335 = vadd.f32 %v312, %v332
    %v336 = vadd.f32 %v313, %v332
    %v337 = vadd.f32 %v314, %v332
    %v338 = vadd.f32 %v315, %v332
    %v339 = vadd.f32 %v316, %v332
    %v340 = vadd.f32 %v317, %v332
    %v341 = vadd.f32 %v318, %v332
    %v342 = vadd.f32 %v319, %v332
    %v343 = vadd.f32 %v320, %v332
    %v344 = vadd.f32 %v321, %v332
    %v345 = vadd.f32 %v322, %v332
    %v346 = vadd.f32 %v323, %v332
    %v347 = vadd.f32 %v324, %v332
    %v348 = vadd.f32 %v325, %v332
    %v349 = vadd.f32 %v326, %v332
    %v350 = vmax.f32 %v334, 0.0
    %v351 = vmax.f32 %v335, 0.0
    %v352 = vmax.f32 %v336, 0.0
    %v353 = vmax.f32 %v337, 0.0
    %v354 = vmax.f32 %v338, 0.0
    %v355 = vmax.f32 %v339, 0.0
    %v356 = vmax.f32 %v340, 0.0
    %v357 = vmax.f32 %v341, 0.0
    %v358 = vmax.f32 %v342, 0.0
    %v359 = vmax.f32 %v343, 0.0
    %v360 = vmax.f32 %v344, 0.0
    %v361 = vmax.f32 %v345, 0.0
    %v362 = vmax.f32 %v346, 0.0
    %v363 = vmax.f32 %v347, 0.0
    %v364 = vmax.f32 %v348, 0.0
    %v365 = vmax.f32 %v349, 0.0
    %366 = vst [vmem:[%s3] sm:$0xff] %v350
    %367 = vst [vmem:[%s3 + $0x8] sm:$0xff] %v351
    %368 = vst [vmem:[%s3 + $0x10] sm:$0xff] %v352
    %369 = vst [vmem:[%s3 + $0x18] sm:$0xff] %v353
    %370 = vst [vmem:[%s3 + $0x20] sm:$0xff] %v354
    %371 = vst [vmem:[%s3 + $0x28] sm:$0xff] %v355
    %372 = vst [vmem:[%s3 + $0x30] sm:$0xff] %v356
    %373 = vst [vmem:[%s3 + $0x38] sm:$0xff] %v357
    %374 = vst [vmem:[%s3 + $0x40] sm:$0xff] %v358
    %375 = vst [vmem:[%s3 + $0x48] sm:$0xff] %v359
    %376 = vst [vmem:[%s3 + $0x50] sm:$0xff] %v360
    %377 = vst [vmem:[%s3 + $0x58] sm:$0xff] %v361
    %378 = vst [vmem:[%s3 + $0x60] sm:$0xff] %v362
    %379 = vst [vmem:[%s3 + $0x68] sm:$0xff] %v363
    %380 = vst [vmem:[%s3 + $0x70] sm:$0xff] %v364
    %381 = vst [vmem:[%s3 + $0x78] sm:$0xff] %v365
  $region21: #{basic_block_forward.2} parent=0 // pred_fallthru
    _
  // Predicated region
  $region22: #{basic_block_forward.2} parent=0 // pred_check
    _
  $region23: #{basic_block_forward.2} parent=0 // pred_check_branch
    %383 = sbr.rel (0) target = $region25
  $region24: #{basic_block_forward.2} parent=0 // pred_region
    _
  $region25: #{basic_block_forward.2} parent=0 // pred_fallthru
    _
  // Predicated region
  $region26: #{basic_block_forward.2} parent=0 // pred_check
    _
  $region27: #{basic_block_forward.2} parent=0 // pred_check_branch
    %385 = sbr.rel (0) target = $region29
  $region28: #{basic_block_forward.2} parent=0 // pred_region
    _
  $region29: #{basic_block_forward.2} parent=0 // pred_fallthru
    _

// kernel: basic_block_forward.3
$region0: #{basic_block_forward.3}
  #allocation0 [shape = 'u32[]', space=smem, size = 0x4, offset = 0x4, fixed_abs, tag = 'smem constant byte address 0x4 - core index']
  #allocation1 [shape = 'u32[144,128]{1,0:T(1,128)}', space=vmem, size = 0x12000, scoped, tag = 'internal scratch']
  #allocation2 [shape = 'f32[128,128]{1,0:T(8,128)}', space=vmem, size = 0x10000, scoped, tag = 'scratch operand']
  %s0 = inlined_call_operand.vmem [shape: bf16[128,128], index: 0, kind: input, shape index: {}]
  %s1 = inlined_call_operand.vmem [shape: bf16[128,128], index: 1, kind: input, shape index: {}]
  %s2 = inlined_call_operand.vmem [shape: f32[1,128], index: 2, kind: input, shape index: {}]
  %s3 = inlined_call_operand.vmem [shape: bf16[128,128], index: 3, kind: input, shape index: {}]
  %s4 = inlined_call_operand.vmem [shape: bf16[128,128], index: 4, kind: input, shape index: {}]
  %s5 = inlined_call_operand.vmem [shape: f32[128,128], index: 5, kind: output, shape index: {}]
  %s6 = sld [smem:[#allocation0]]
  $region38: #{basic_block_forward.3} parent=0
    _
  %s8 = ssub.s32 1, %s6
  %s9 = scalar_select 0, %s8, %s6
  // Predicated region
  $region2: #{basic_block_forward.3} parent=0 // pred_check
    _
  $region3: #{basic_block_forward.3} parent=0 // pred_check_branch
    %11 = sbr.rel (0) target = $region5
  $region4: #{basic_block_forward.3} parent=0 // pred_region
    _
  $region5: #{basic_block_forward.3} parent=0 // pred_fallthru
    _
  // Predicated region
  $region6: #{basic_block_forward.3} parent=0 // pred_check
    _
  $region7: #{basic_block_forward.3} parent=0 // pred_check_branch
    %13 = sbr.rel (0) target = $region9
  $region8: #{basic_block_forward.3} parent=0 // pred_region
    _
  $region9: #{basic_block_forward.3} parent=0 // pred_fallthru
    _
  // Predicated region
  $region10: #{basic_block_forward.3} parent=0 // pred_check
    _
  $region11: #{basic_block_forward.3} parent=0 // pred_check_branch
    %15 = sbr.rel (0) target = $region13
  $region12: #{basic_block_forward.3} parent=0 // pred_region
    _
  $region13: #{basic_block_forward.3} parent=0 // pred_fallthru
    _
  // Predicated region
  $region14: #{basic_block_forward.3} parent=0 // pred_check
    _
  $region15: #{basic_block_forward.3} parent=0 // pred_check_branch
    %17 = sbr.rel (0) target = $region17
  $region16: #{basic_block_forward.3} parent=0 // pred_region
    _
  $region17: #{basic_block_forward.3} parent=0 // pred_fallthru
    _
  // Predicated region
  $region18: #{basic_block_forward.3} parent=0 // pred_check
    _
  $region19: #{basic_block_forward.3} parent=0 // pred_check_branch
    %19 = sbr.rel (0) target = $region21
  $region20: #{basic_block_forward.3} parent=0 // pred_region
    _
  $region21: #{basic_block_forward.3} parent=0 // pred_fallthru
    _
  %p21 = scmp.eq.s32.totalorder 0, 0
  // Predicated region
  $region22: #{basic_block_forward.3} parent=0 // pred_check
    %p22 = pneg %p21
  $region23: #{basic_block_forward.3} parent=0 // pred_check_branch
    %24 = sbr.rel (%p22) target = $region25
  $region24: #{basic_block_forward.3} parent=0 // pred_region
    %25 = vst [vmem:[#allocation2] sm:$0xff] 0.0
    %26 = vst [vmem:[#allocation2 + $0x8] sm:$0xff] 0.0
    %27 = vst [vmem:[#allocation2 + $0x10] sm:$0xff] 0.0
    %28 = vst [vmem:[#allocation2 + $0x18] sm:$0xff] 0.0
    %29 = vst [vmem:[#allocation2 + $0x20] sm:$0xff] 0.0
    %30 = vst [vmem:[#allocation2 + $0x28] sm:$0xff] 0.0
    %31 = vst [vmem:[#allocation2 + $0x30] sm:$0xff] 0.0
    %32 = vst [vmem:[#allocation2 + $0x38] sm:$0xff] 0.0
    %33 = vst [vmem:[#allocation2 + $0x40] sm:$0xff] 0.0
    %34 = vst [vmem:[#allocation2 + $0x48] sm:$0xff] 0.0
    %35 = vst [vmem:[#allocation2 + $0x50] sm:$0xff] 0.0
    %36 = vst [vmem:[#allocation2 + $0x58] sm:$0xff] 0.0
    %37 = vst [vmem:[#allocation2 + $0x60] sm:$0xff] 0.0
    %38 = vst [vmem:[#allocation2 + $0x68] sm:$0xff] 0.0
    %39 = vst [vmem:[#allocation2 + $0x70] sm:$0xff] 0.0
    %40 = vst [vmem:[#allocation2 + $0x78] sm:$0xff] 0.0
  $region25: #{basic_block_forward.3} parent=0 // pred_fallthru
    _
  %v41 = vld [vmem:[#allocation2] sm:$0xff]
  %v42 = vld [vmem:[#allocation2 + $0x8] sm:$0xff]
  %v43 = vld [vmem:[#allocation2 + $0x10] sm:$0xff]
  %v44 = vld [vmem:[#allocation2 + $0x18] sm:$0xff]
  %v45 = vld [vmem:[#allocation2 + $0x20] sm:$0xff]
  %v46 = vld [vmem:[#allocation2 + $0x28] sm:$0xff]
  %v47 = vld [vmem:[#allocation2 + $0x30] sm:$0xff]
  %v48 = vld [vmem:[#allocation2 + $0x38] sm:$0xff]
  %v49 = vld [vmem:[#allocation2 + $0x40] sm:$0xff]
  %v50 = vld [vmem:[#allocation2 + $0x48] sm:$0xff]
  %v51 = vld [vmem:[#allocation2 + $0x50] sm:$0xff]
  %v52 = vld [vmem:[#allocation2 + $0x58] sm:$0xff]
  %v53 = vld [vmem:[#allocation2 + $0x60] sm:$0xff]
  %v54 = vld [vmem:[#allocation2 + $0x68] sm:$0xff]
  %v55 = vld [vmem:[#allocation2 + $0x70] sm:$0xff]
  %v56 = vld [vmem:[#allocation2 + $0x78] sm:$0xff]
  %v57 = vld [vmem:[%s0] sm:$0xf]
  %v58 = vld [vmem:[%s0 + $0x4] sm:$0xf]
  %v59 = vld [vmem:[%s0 + $0x8] sm:$0xf]
  %v60 = vld [vmem:[%s0 + $0xc] sm:$0xf]
  %v61 = vld [vmem:[%s0 + $0x10] sm:$0xf]
  %v62 = vld [vmem:[%s0 + $0x14] sm:$0xf]
  %v63 = vld [vmem:[%s0 + $0x18] sm:$0xf]
  %v64 = vld [vmem:[%s0 + $0x1c] sm:$0xf]
  %v65 = vld [vmem:[%s0 + $0x20] sm:$0xf]
  %v66 = vld [vmem:[%s0 + $0x24] sm:$0xf]
  %v67 = vld [vmem:[%s0 + $0x28] sm:$0xf]
  %v68 = vld [vmem:[%s0 + $0x2c] sm:$0xf]
  %v69 = vld [vmem:[%s0 + $0x30] sm:$0xf]
  %v70 = vld [vmem:[%s0 + $0x34] sm:$0xf]
  %v71 = vld [vmem:[%s0 + $0x38] sm:$0xf]
  %v72 = vld [vmem:[%s0 + $0x3c] sm:$0xf]
  %v73 = vld [vmem:[%s1] sm:$0xf]
  %v74 = vld [vmem:[%s1 + $0x4] sm:$0xf]
  %v75 = vld [vmem:[%s1 + $0x8] sm:$0xf]
  %v76 = vld [vmem:[%s1 + $0xc] sm:$0xf]
  %v77 = vld [vmem:[%s1 + $0x10] sm:$0xf]
  %v78 = vld [vmem:[%s1 + $0x14] sm:$0xf]
  %v79 = vld [vmem:[%s1 + $0x18] sm:$0xf]
  %v80 = vld [vmem:[%s1 + $0x1c] sm:$0xf]
  %v81 = vld [vmem:[%s1 + $0x20] sm:$0xf]
  %v82 = vld [vmem:[%s1 + $0x24] sm:$0xf]
  %v83 = vld [vmem:[%s1 + $0x28] sm:$0xf]
  %v84 = vld [vmem:[%s1 + $0x2c] sm:$0xf]
  %v85 = vld [vmem:[%s1 + $0x30] sm:$0xf]
  %v86 = vld [vmem:[%s1 + $0x34] sm:$0xf]
  %v87 = vld [vmem:[%s1 + $0x38] sm:$0xf]
  %v88 = vld [vmem:[%s1 + $0x3c] sm:$0xf]
  %v105 = vunpack.c.l.b16 %v57
  %v106 = vunpack.c.l.b16 %v58
  %v107 = vunpack.c.l.b16 %v59
  %v108 = vunpack.c.l.b16 %v60
  %v109 = vunpack.c.l.b16 %v61
  %v110 = vunpack.c.l.b16 %v62
  %v111 = vunpack.c.l.b16 %v63
  %v112 = vunpack.c.l.b16 %v64
  %v113 = vunpack.c.l.b16 %v65
  %v114 = vunpack.c.l.b16 %v66
  %v115 = vunpack.c.l.b16 %v67
  %v116 = vunpack.c.l.b16 %v68
  %v117 = vunpack.c.l.b16 %v69
  %v118 = vunpack.c.l.b16 %v70
  %v119 = vunpack.c.l.b16 %v71
  %v120 = vunpack.c.l.b16 %v72
  %v121 = vpack.c.b16 %v106, %v105
  %v122 = vpack.c.b16 %v108, %v107
  %v123 = vpack.c.b16 %v110, %v109
  %v124 = vpack.c.b16 %v112, %v111
  %v125 = vpack.c.b16 %v114, %v113
  %v126 = vpack.c.b16 %v116, %v115
  %v127 = vpack.c.b16 %v118, %v117
  %v128 = vpack.c.b16 %v120, %v119
  %v153 = vunpack.c.l.b16 %v73
  %v154 = vunpack.c.l.b16 %v74
  %v155 = vunpack.c.l.b16 %v75
  %v156 = vunpack.c.l.b16 %v76
  %v157 = vunpack.c.l.b16 %v77
  %v158 = vunpack.c.l.b16 %v78
  %v159 = vunpack.c.l.b16 %v79
  %v160 = vunpack.c.l.b16 %v80
  %v161 = vunpack.c.l.b16 %v81
  %v162 = vunpack.c.l.b16 %v82
  %v163 = vunpack.c.l.b16 %v83
  %v164 = vunpack.c.l.b16 %v84
  %v165 = vunpack.c.l.b16 %v85
  %v166 = vunpack.c.l.b16 %v86
  %v167 = vunpack.c.l.b16 %v87
  %v168 = vunpack.c.l.b16 %v88
  %v169 = vpack.c.b16 %v154, %v153
  %v170 = vpack.c.b16 %v156, %v155
  %v171 = vpack.c.b16 %v158, %v157
  %v172 = vpack.c.b16 %v160, %v159
  %v173 = vpack.c.b16 %v162, %v161
  %v174 = vpack.c.b16 %v164, %v163
  %v175 = vpack.c.b16 %v166, %v165
  %v176 = vpack.c.b16 %v168, %v167
  %185 = vmatprep.subr.bf16.mxu0 0
  %186 = vmatpush1.bf16.msra.mxu0 %v169
  %187 = vmatprep.subr.bf16.mxu0 0
  %188 = vmatpush1.bf16.msra.mxu0 %v170
  %189 = vmatprep.subr.bf16.mxu0 0
  %190 = vmatpush1.bf16.msra.mxu0 %v171
  %191 = vmatprep.subr.bf16.mxu0 0
  %192 = vmatpush1.bf16.msra.mxu0 %v172
  %193 = vmatprep.subr.bf16.mxu0 0
  %194 = vmatpush1.bf16.msra.mxu0 %v173
  %195 = vmatprep.subr.bf16.mxu0 0
  %196 = vmatpush1.bf16.msra.mxu0 %v174
  %197 = vmatprep.subr.bf16.mxu0 0
  %198 = vmatpush1.bf16.msra.mxu0 %v175
  %199 = vmatprep.subr.bf16.mxu0 0
  %200 = vmatpush1.bf16.msra.mxu0 %v176
  %201 = vmatprep.subr.bf16.mxu0 0
  %202 = vmatpush1.bf16.msra.mxu0 0
  %203 = vmatprep.subr.bf16.mxu0 0
  %204 = vmatpush1.bf16.msra.mxu0 0
  %205 = vmatprep.subr.bf16.mxu0 0
  %206 = vmatpush1.bf16.msra.mxu0 0
  %207 = vmatprep.subr.bf16.mxu0 0
  %208 = vmatpush1.bf16.msra.mxu0 0
  %209 = vmatprep.subr.bf16.mxu0 0
  %210 = vmatpush1.bf16.msra.mxu0 0
  %211 = vmatprep.subr.bf16.mxu0 0
  %212 = vmatpush1.bf16.msra.mxu0 0
  %213 = vmatprep.subr.bf16.mxu0 0
  %214 = vmatpush1.bf16.msra.mxu0 0
  %215 = vmatprep.subr.bf16.mxu0 0
  %216 = vmatpush1.bf16.msra.mxu0 0
  %217 = vmatprep.mubr.bf16.mxu0 0
  %218 = vmatmul.mubr.bf16.gmra.mrb[0].mxu0 %v121
  %v219 = vpop.f32.mrb[0].mxu0
  %v220 = vadd.f32 0.0, %v219
  %v221 = vpop.f32.mrb[0].mxu0
  %v222 = vpop.f32.mrb[0].mxu0
  %v223 = vadd.f32 0.0, %v222
  %v224 = vpop.f32.mrb[0].mxu0
  %225 = vmatprep.mubr.bf16.mxu0 0
  %226 = vmatmul.mubr.bf16.gmra.mrb[0].mxu0 %v122
  %v227 = vpop.f32.mrb[0].mxu0
  %v228 = vadd.f32 0.0, %v227
  %v229 = vpop.f32.mrb[0].mxu0
  %v230 = vpop.f32.mrb[0].mxu0
  %v231 = vadd.f32 0.0, %v230
  %v232 = vpop.f32.mrb[0].mxu0
  %233 = vmatprep.mubr.bf16.mxu0 0
  %234 = vmatmul.mubr.bf16.gmra.mrb[0].mxu0 %v123
  %v235 = vpop.f32.mrb[0].mxu0
  %v236 = vadd.f32 0.0, %v235
  %v237 = vpop.f32.mrb[0].mxu0
  %v238 = vpop.f32.mrb[0].mxu0
  %v239 = vadd.f32 0.0, %v238
  %v240 = vpop.f32.mrb[0].mxu0
  %241 = vmatprep.mubr.bf16.mxu0 0
  %242 = vmatmul.mubr.bf16.gmra.mrb[0].mxu0 %v124
  %v243 = vpop.f32.mrb[0].mxu0
  %v244 = vadd.f32 0.0, %v243
  %v245 = vpop.f32.mrb[0].mxu0
  %v246 = vpop.f32.mrb[0].mxu0
  %v247 = vadd.f32 0.0, %v246
  %v248 = vpop.f32.mrb[0].mxu0
  %249 = vmatprep.mubr.bf16.mxu0 0
  %250 = vmatmul.mubr.bf16.gmra.mrb[0].mxu0 %v125
  %v251 = vpop.f32.mrb[0].mxu0
  %v252 = vadd.f32 0.0, %v251
  %v253 = vpop.f32.mrb[0].mxu0
  %v254 = vpop.f32.mrb[0].mxu0
  %v255 = vadd.f32 0.0, %v254
  %v256 = vpop.f32.mrb[0].mxu0
  %257 = vmatprep.mubr.bf16.mxu0 0
  %258 = vmatmul.mubr.bf16.gmra.mrb[0].mxu0 %v126
  %v259 = vpop.f32.mrb[0].mxu0
  %v260 = vadd.f32 0.0, %v259
  %v261 = vpop.f32.mrb[0].mxu0
  %v262 = vpop.f32.mrb[0].mxu0
  %v263 = vadd.f32 0.0, %v262
  %v264 = vpop.f32.mrb[0].mxu0
  %265 = vmatprep.mubr.bf16.mxu0 0
  %266 = vmatmul.mubr.bf16.gmra.mrb[0].mxu0 %v127
  %v267 = vpop.f32.mrb[0].mxu0
  %v268 = vadd.f32 0.0, %v267
  %v269 = vpop.f32.mrb[0].mxu0
  %v270 = vpop.f32.mrb[0].mxu0
  %v271 = vadd.f32 0.0, %v270
  %v272 = vpop.f32.mrb[0].mxu0
  %273 = vmatprep.mubr.bf16.mxu0 0
  %274 = vmatmul.mubr.bf16.gmra.mrb[0].mxu0 %v128
  %v275 = vpop.f32.mrb[0].mxu0
  %v276 = vadd.f32 0.0, %v275
  %v277 = vpop.f32.mrb[0].mxu0
  %v278 = vpop.f32.mrb[0].mxu0
  %v279 = vadd.f32 0.0, %v278
  %v280 = vpop.f32.mrb[0].mxu0
  %281 = vdwg.mxu0
  %v282 = vadd.f32 %v41, %v220
  %v283 = vadd.f32 %v42, %v223
  %v284 = vadd.f32 %v43, %v228
  %v285 = vadd.f32 %v44, %v231
  %v286 = vadd.f32 %v45, %v236
  %v287 = vadd.f32 %v46, %v239
  %v288 = vadd.f32 %v47, %v244
  %v289 = vadd.f32 %v48, %v247
  %v290 = vadd.f32 %v49, %v252
  %v291 = vadd.f32 %v50, %v255
  %v292 = vadd.f32 %v51, %v260
  %v293 = vadd.f32 %v52, %v263
  %v294 = vadd.f32 %v53, %v268
  %v295 = vadd.f32 %v54, %v271
  %v296 = vadd.f32 %v55, %v276
  %v297 = vadd.f32 %v56, %v279
  %298 = vst [vmem:[#allocation2] sm:$0xff] %v282
  %299 = vst [vmem:[#allocation2 + $0x8] sm:$0xff] %v283
  %300 = vst [vmem:[#allocation2 + $0x10] sm:$0xff] %v284
  %301 = vst [vmem:[#allocation2 + $0x18] sm:$0xff] %v285
  %302 = vst [vmem:[#allocation2 + $0x20] sm:$0xff] %v286
  %303 = vst [vmem:[#allocation2 + $0x28] sm:$0xff] %v287
  %304 = vst [vmem:[#allocation2 + $0x30] sm:$0xff] %v288
  %305 = vst [vmem:[#allocation2 + $0x38] sm:$0xff] %v289
  %306 = vst [vmem:[#allocation2 + $0x40] sm:$0xff] %v290
  %307 = vst [vmem:[#allocation2 + $0x48] sm:$0xff] %v291
  %308 = vst [vmem:[#allocation2 + $0x50] sm:$0xff] %v292
  %309 = vst [vmem:[#allocation2 + $0x58] sm:$0xff] %v293
  %310 = vst [vmem:[#allocation2 + $0x60] sm:$0xff] %v294
  %311 = vst [vmem:[#allocation2 + $0x68] sm:$0xff] %v295
  %312 = vst [vmem:[#allocation2 + $0x70] sm:$0xff] %v296
  %313 = vst [vmem:[#allocation2 + $0x78] sm:$0xff] %v297
  // Predicated region
  $region26: #{basic_block_forward.3} parent=0 // pred_check
    %p314 = pneg %p21
  $region27: #{basic_block_forward.3} parent=0 // pred_check_branch
    %316 = sbr.rel (%p314) target = $region29
  $region28: #{basic_block_forward.3} parent=0 // pred_region
    %v317 = vld [vmem:[#allocation2] sm:$0xff]
    %v318 = vld [vmem:[#allocation2 + $0x8] sm:$0xff]
    %v319 = vld [vmem:[#allocation2 + $0x10] sm:$0xff]
    %v320 = vld [vmem:[#allocation2 + $0x18] sm:$0xff]
    %v321 = vld [vmem:[#allocation2 + $0x20] sm:$0xff]
    %v322 = vld [vmem:[#allocation2 + $0x28] sm:$0xff]
    %v323 = vld [vmem:[#allocation2 + $0x30] sm:$0xff]
    %v324 = vld [vmem:[#allocation2 + $0x38] sm:$0xff]
    %v325 = vld [vmem:[#allocation2 + $0x40] sm:$0xff]
    %v326 = vld [vmem:[#allocation2 + $0x48] sm:$0xff]
    %v327 = vld [vmem:[#allocation2 + $0x50] sm:$0xff]
    %v328 = vld [vmem:[#allocation2 + $0x58] sm:$0xff]
    %v329 = vld [vmem:[#allocation2 + $0x60] sm:$0xff]
    %v330 = vld [vmem:[#allocation2 + $0x68] sm:$0xff]
    %v331 = vld [vmem:[#allocation2 + $0x70] sm:$0xff]
    %v332 = vld [vmem:[#allocation2 + $0x78] sm:$0xff]
    %v333 = vld [vmem:[%s2] sm:$0x1]
    %v335 = vlaneseq
    %v336 = vshrl.u32 %v335, 7
    %v337 = vsub.s32 0, %v336
    %v338 = vrot.slane %v333, %v337
    %v340 = vadd.f32 %v317, %v338
    %v341 = vadd.f32 %v318, %v338
    %v342 = vadd.f32 %v319, %v338
    %v343 = vadd.f32 %v320, %v338
    %v344 = vadd.f32 %v321, %v338
    %v345 = vadd.f32 %v322, %v338
    %v346 = vadd.f32 %v323, %v338
    %v347 = vadd.f32 %v324, %v338
    %v348 = vadd.f32 %v325, %v338
    %v349 = vadd.f32 %v326, %v338
    %v350 = vadd.f32 %v327, %v338
    %v351 = vadd.f32 %v328, %v338
    %v352 = vadd.f32 %v329, %v338
    %v353 = vadd.f32 %v330, %v338
    %v354 = vadd.f32 %v331, %v338
    %v355 = vadd.f32 %v332, %v338
    %v356 = vld [vmem:[%s3] sm:$0xf]
    %v357 = vld [vmem:[%s3 + $0x4] sm:$0xf]
    %v358 = vld [vmem:[%s3 + $0x8] sm:$0xf]
    %v359 = vld [vmem:[%s3 + $0xc] sm:$0xf]
    %v360 = vld [vmem:[%s3 + $0x10] sm:$0xf]
    %v361 = vld [vmem:[%s3 + $0x14] sm:$0xf]
    %v362 = vld [vmem:[%s3 + $0x18] sm:$0xf]
    %v363 = vld [vmem:[%s3 + $0x1c] sm:$0xf]
    %v364 = vld [vmem:[%s3 + $0x20] sm:$0xf]
    %v365 = vld [vmem:[%s3 + $0x24] sm:$0xf]
    %v366 = vld [vmem:[%s3 + $0x28] sm:$0xf]
    %v367 = vld [vmem:[%s3 + $0x2c] sm:$0xf]
    %v368 = vld [vmem:[%s3 + $0x30] sm:$0xf]
    %v369 = vld [vmem:[%s3 + $0x34] sm:$0xf]
    %v370 = vld [vmem:[%s3 + $0x38] sm:$0xf]
    %v371 = vld [vmem:[%s3 + $0x3c] sm:$0xf]
    %v372 = vld [vmem:[%s4] sm:$0xf]
    %v373 = vld [vmem:[%s4 + $0x4] sm:$0xf]
    %v374 = vld [vmem:[%s4 + $0x8] sm:$0xf]
    %v375 = vld [vmem:[%s4 + $0xc] sm:$0xf]
    %v376 = vld [vmem:[%s4 + $0x10] sm:$0xf]
    %v377 = vld [vmem:[%s4 + $0x14] sm:$0xf]
    %v378 = vld [vmem:[%s4 + $0x18] sm:$0xf]
    %v379 = vld [vmem:[%s4 + $0x1c] sm:$0xf]
    %v380 = vld [vmem:[%s4 + $0x20] sm:$0xf]
    %v381 = vld [vmem:[%s4 + $0x24] sm:$0xf]
    %v382 = vld [vmem:[%s4 + $0x28] sm:$0xf]
    %v383 = vld [vmem:[%s4 + $0x2c] sm:$0xf]
    %v384 = vld [vmem:[%s4 + $0x30] sm:$0xf]
    %v385 = vld [vmem:[%s4 + $0x34] sm:$0xf]
    %v386 = vld [vmem:[%s4 + $0x38] sm:$0xf]
    %v387 = vld [vmem:[%s4 + $0x3c] sm:$0xf]
    %v404 = vunpack.c.l.b16 %v356
    %v405 = vunpack.c.l.b16 %v357
    %v406 = vunpack.c.l.b16 %v358
    %v407 = vunpack.c.l.b16 %v359
    %v408 = vunpack.c.l.b16 %v360
    %v409 = vunpack.c.l.b16 %v361
    %v410 = vunpack.c.l.b16 %v362
    %v411 = vunpack.c.l.b16 %v363
    %v412 = vunpack.c.l.b16 %v364
    %v413 = vunpack.c.l.b16 %v365
    %v414 = vunpack.c.l.b16 %v366
    %v415 = vunpack.c.l.b16 %v367
    %v416 = vunpack.c.l.b16 %v368
    %v417 = vunpack.c.l.b16 %v369
    %v418 = vunpack.c.l.b16 %v370
    %v419 = vunpack.c.l.b16 %v371
    %v420 = vpack.c.b16 %v405, %v404
    %v421 = vpack.c.b16 %v407, %v406
    %v422 = vpack.c.b16 %v409, %v408
    %v423 = vpack.c.b16 %v411, %v410
    %v424 = vpack.c.b16 %v413, %v412
    %v425 = vpack.c.b16 %v415, %v414
    %v426 = vpack.c.b16 %v417, %v416
    %v427 = vpack.c.b16 %v419, %v418
    %v452 = vunpack.c.l.b16 %v372
    %v453 = vunpack.c.l.b16 %v373
    %v454 = vunpack.c.l.b16 %v374
    %v455 = vunpack.c.l.b16 %v375
    %v456 = vunpack.c.l.b16 %v376
    %v457 = vunpack.c.l.b16 %v377
    %v458 = vunpack.c.l.b16 %v378
    %v459 = vunpack.c.l.b16 %v379
    %v460 = vunpack.c.l.b16 %v380
    %v461 = vunpack.c.l.b16 %v381
    %v462 = vunpack.c.l.b16 %v382
    %v463 = vunpack.c.l.b16 %v383
    %v464 = vunpack.c.l.b16 %v384
    %v465 = vunpack.c.l.b16 %v385
    %v466 = vunpack.c.l.b16 %v386
    %v467 = vunpack.c.l.b16 %v387
    %v468 = vpack.c.b16 %v453, %v452
    %v469 = vpack.c.b16 %v455, %v454
    %v470 = vpack.c.b16 %v457, %v456
    %v471 = vpack.c.b16 %v459, %v458
    %v472 = vpack.c.b16 %v461, %v460
    %v473 = vpack.c.b16 %v463, %v462
    %v474 = vpack.c.b16 %v465, %v464
    %v475 = vpack.c.b16 %v467, %v466
    %484 = vmatprep.subr.bf16.mxu0 0
    %485 = vmatpush1.bf16.msra.mxu0 %v468
    %486 = vmatprep.subr.bf16.mxu0 0
    %487 = vmatpush1.bf16.msra.mxu0 %v469
    %488 = vmatprep.subr.bf16.mxu0 0
    %489 = vmatpush1.bf16.msra.mxu0 %v470
    %490 = vmatprep.subr.bf16.mxu0 0
    %491 = vmatpush1.bf16.msra.mxu0 %v471
    %492 = vmatprep.subr.bf16.mxu0 0
    %493 = vmatpush1.bf16.msra.mxu0 %v472
    %494 = vmatprep.subr.bf16.mxu0 0
    %495 = vmatpush1.bf16.msra.mxu0 %v473
    %496 = vmatprep.subr.bf16.mxu0 0
    %497 = vmatpush1.bf16.msra.mxu0 %v474
    %498 = vmatprep.subr.bf16.mxu0 0
    %499 = vmatpush1.bf16.msra.mxu0 %v475
    %500 = vmatprep.subr.bf16.mxu0 0
    %501 = vmatpush1.bf16.msra.mxu0 0
    %502 = vmatprep.subr.bf16.mxu0 0
    %503 = vmatpush1.bf16.msra.mxu0 0
    %504 = vmatprep.subr.bf16.mxu0 0
    %505 = vmatpush1.bf16.msra.mxu0 0
    %506 = vmatprep.subr.bf16.mxu0 0
    %507 = vmatpush1.bf16.msra.mxu0 0
    %508 = vmatprep.subr.bf16.mxu0 0
    %509 = vmatpush1.bf16.msra.mxu0 0
    %510 = vmatprep.subr.bf16.mxu0 0
    %511 = vmatpush1.bf16.msra.mxu0 0
    %512 = vmatprep.subr.bf16.mxu0 0
    %513 = vmatpush1.bf16.msra.mxu0 0
    %514 = vmatprep.subr.bf16.mxu0 0
    %515 = vmatpush1.bf16.msra.mxu0 0
    %516 = vmatprep.mubr.bf16.mxu0 0
    %517 = vmatmul.mubr.bf16.gmra.mrb[0].mxu0 %v420
    %v518 = vpop.f32.mrb[0].mxu0
    %v519 = vadd.f32 0.0, %v518
    %v520 = vpop.f32.mrb[0].mxu0
    %v521 = vpop.f32.mrb[0].mxu0
    %v522 = vadd.f32 0.0, %v521
    %v523 = vpop.f32.mrb[0].mxu0
    %524 = vmatprep.mubr.bf16.mxu0 0
    %525 = vmatmul.mubr.bf16.gmra.mrb[0].mxu0 %v421
    %v526 = vpop.f32.mrb[0].mxu0
    %v527 = vadd.f32 0.0, %v526
    %v528 = vpop.f32.mrb[0].mxu0
    %v529 = vpop.f32.mrb[0].mxu0
    %v530 = vadd.f32 0.0, %v529
    %v531 = vpop.f32.mrb[0].mxu0
    %532 = vmatprep.mubr.bf16.mxu0 0
    %533 = vmatmul.mubr.bf16.gmra.mrb[0].mxu0 %v422
    %v534 = vpop.f32.mrb[0].mxu0
    %v535 = vadd.f32 0.0, %v534
    %v536 = vpop.f32.mrb[0].mxu0
    %v537 = vpop.f32.mrb[0].mxu0
    %v538 = vadd.f32 0.0, %v537
    %v539 = vpop.f32.mrb[0].mxu0
    %540 = vmatprep.mubr.bf16.mxu0 0
    %541 = vmatmul.mubr.bf16.gmra.mrb[0].mxu0 %v423
    %v542 = vpop.f32.mrb[0].mxu0
    %v543 = vadd.f32 0.0, %v542
    %v544 = vpop.f32.mrb[0].mxu0
    %v545 = vpop.f32.mrb[0].mxu0
    %v546 = vadd.f32 0.0, %v545
    %v547 = vpop.f32.mrb[0].mxu0
    %548 = vmatprep.mubr.bf16.mxu0 0
    %549 = vmatmul.mubr.bf16.gmra.mrb[0].mxu0 %v424
    %v550 = vpop.f32.mrb[0].mxu0
    %v551 = vadd.f32 0.0, %v550
    %v552 = vpop.f32.mrb[0].mxu0
    %v553 = vpop.f32.mrb[0].mxu0
    %v554 = vadd.f32 0.0, %v553
    %v555 = vpop.f32.mrb[0].mxu0
    %556 = vmatprep.mubr.bf16.mxu0 0
    %557 = vmatmul.mubr.bf16.gmra.mrb[0].mxu0 %v425
    %v558 = vpop.f32.mrb[0].mxu0
    %v559 = vadd.f32 0.0, %v558
    %v560 = vpop.f32.mrb[0].mxu0
    %v561 = vpop.f32.mrb[0].mxu0
    %v562 = vadd.f32 0.0, %v561
    %v563 = vpop.f32.mrb[0].mxu0
    %564 = vmatprep.mubr.bf16.mxu0 0
    %565 = vmatmul.mubr.bf16.gmra.mrb[0].mxu0 %v426
    %v566 = vpop.f32.mrb[0].mxu0
    %v567 = vadd.f32 0.0, %v566
    %v568 = vpop.f32.mrb[0].mxu0
    %v569 = vpop.f32.mrb[0].mxu0
    %v570 = vadd.f32 0.0, %v569
    %v571 = vpop.f32.mrb[0].mxu0
    %572 = vmatprep.mubr.bf16.mxu0 0
    %573 = vmatmul.mubr.bf16.gmra.mrb[0].mxu0 %v427
    %v574 = vpop.f32.mrb[0].mxu0
    %v575 = vadd.f32 0.0, %v574
    %v576 = vpop.f32.mrb[0].mxu0
    %v577 = vpop.f32.mrb[0].mxu0
    %v578 = vadd.f32 0.0, %v577
    %v579 = vpop.f32.mrb[0].mxu0
    %580 = vdwg.mxu0
    %v581 = vadd.f32 %v340, %v519
    %v582 = vadd.f32 %v341, %v522
    %v583 = vadd.f32 %v342, %v527
    %v584 = vadd.f32 %v343, %v530
    %v585 = vadd.f32 %v344, %v535
    %v586 = vadd.f32 %v345, %v538
    %v587 = vadd.f32 %v346, %v543
    %v588 = vadd.f32 %v347, %v546
    %v589 = vadd.f32 %v348, %v551
    %v590 = vadd.f32 %v349, %v554
    %v591 = vadd.f32 %v350, %v559
    %v592 = vadd.f32 %v351, %v562
    %v593 = vadd.f32 %v352, %v567
    %v594 = vadd.f32 %v353, %v570
    %v595 = vadd.f32 %v354, %v575
    %v596 = vadd.f32 %v355, %v578
    %v597 = vmax.f32 %v581, 0.0
    %v598 = vmax.f32 %v582, 0.0
    %v599 = vmax.f32 %v583, 0.0
    %v600 = vmax.f32 %v584, 0.0
    %v601 = vmax.f32 %v585, 0.0
    %v602 = vmax.f32 %v586, 0.0
    %v603 = vmax.f32 %v587, 0.0
    %v604 = vmax.f32 %v588, 0.0
    %v605 = vmax.f32 %v589, 0.0
    %v606 = vmax.f32 %v590, 0.0
    %v607 = vmax.f32 %v591, 0.0
    %v608 = vmax.f32 %v592, 0.0
    %v609 = vmax.f32 %v593, 0.0
    %v610 = vmax.f32 %v594, 0.0
    %v611 = vmax.f32 %v595, 0.0
    %v612 = vmax.f32 %v596, 0.0
    %613 = vst [vmem:[%s5] sm:$0xff] %v597
    %614 = vst [vmem:[%s5 + $0x8] sm:$0xff] %v598
    %615 = vst [vmem:[%s5 + $0x10] sm:$0xff] %v599
    %616 = vst [vmem:[%s5 + $0x18] sm:$0xff] %v600
    %617 = vst [vmem:[%s5 + $0x20] sm:$0xff] %v601
    %618 = vst [vmem:[%s5 + $0x28] sm:$0xff] %v602
    %619 = vst [vmem:[%s5 + $0x30] sm:$0xff] %v603
    %620 = vst [vmem:[%s5 + $0x38] sm:$0xff] %v604
    %621 = vst [vmem:[%s5 + $0x40] sm:$0xff] %v605
    %622 = vst [vmem:[%s5 + $0x48] sm:$0xff] %v606
    %623 = vst [vmem:[%s5 + $0x50] sm:$0xff] %v607
    %624 = vst [vmem:[%s5 + $0x58] sm:$0xff] %v608
    %625 = vst [vmem:[%s5 + $0x60] sm:$0xff] %v609
    %626 = vst [vmem:[%s5 + $0x68] sm:$0xff] %v610
    %627 = vst [vmem:[%s5 + $0x70] sm:$0xff] %v611
    %628 = vst [vmem:[%s5 + $0x78] sm:$0xff] %v612
  $region29: #{basic_block_forward.3} parent=0 // pred_fallthru
    _
  // Predicated region
  $region30: #{basic_block_forward.3} parent=0 // pred_check
    _
  $region31: #{basic_block_forward.3} parent=0 // pred_check_branch
    %630 = sbr.rel (0) target = $region33
  $region32: #{basic_block_forward.3} parent=0 // pred_region
    _
  $region33: #{basic_block_forward.3} parent=0 // pred_fallthru
    _
  // Predicated region
  $region34: #{basic_block_forward.3} parent=0 // pred_check
    _
  $region35: #{basic_block_forward.3} parent=0 // pred_check_branch
    %632 = sbr.rel (0) target = $region37
  $region36: #{basic_block_forward.3} parent=0 // pred_region
    _
  $region37: #{basic_block_forward.3} parent=0 // pred_fallthru
    _

</llo_original>
